<compile_context>
chip_gen: v5e
topology: v5e:2x2
jax: 0.10.0
libtpu: 0.0.40
codegen_flags: <defaults>
</compile_context>

<pallas_src>
import jax
import jax.numpy as jnp
from jax import lax
from jax.experimental import pallas as pl
from jax.experimental.pallas import tpu as pltpu


# ---------------------------------------------------------------------------
# Kernel 1: fused depthwise 3x3 + pointwise 1x1 (+ biases) + partial BN stats
#   x_ref    : (1, C, H*W)     one sample, channels on sublanes, pixels on lanes
#   mask_ref : (9, H*W)        border-validity mask per 3x3 tap
#   wd_ref   : (C, 9)          depthwise taps, column k = (kh=k//3, kw=k%3)
#   bd_ref   : (C, 1)          depthwise bias
#   wp_ref   : (Cout, C)       pointwise weights
#   bp_ref   : (Cout, 1)       pointwise bias
#   y_ref    : (1, Cout, H*W)  pre-BN activations
#   sum_ref / sumsq_ref : (1, Cout, 1)  per-sample partial BN statistics
# ---------------------------------------------------------------------------
def _make_fused_dw_pw_kernel(H, W):
    def kernel(x_ref, mask_ref, wd_ref, bd_ref, wp_ref, bp_ref,
               y_ref, sum_ref, sumsq_ref):
        C, HW = x_ref.shape[1], x_ref.shape[2]
        Cout = wp_ref.shape[0]

        x = x_ref[0]                       # (C, HW)
        mask = mask_ref[...]               # (9, HW)
        wd = wd_ref[...]                   # (C, 9)
        wp = wp_ref[...]                   # (Cout, C)

        # depthwise 3x3: 9 static lane-rolls of the flattened H*W axis
        acc = jnp.zeros((C, HW), jnp.float32)
        for k in range(9):                           # static unroll (VPU MACs)
            oh = k // 3 - 1
            ow = k % 3 - 1
            off = oh * W + ow                        # pixel offset of this tap
            shift = (-off) % HW                      # static rotate amount
            shifted = x if shift == 0 else pltpu.roll(x, shift, 1)
            acc = acc + (shifted * mask[k:k + 1, :]) * wd[:, k:k + 1]
        acc = acc + bd_ref[...]                      # (C, 1) broadcast

        # pointwise 1x1 as VPU broadcast-MAC over Cin (Cin tiny -> skip MXU)
        y = jnp.zeros((Cout, HW), jnp.float32) + bp_ref[...]
        for ci in range(C):                          # static unroll
            y = y + wp[:, ci:ci + 1] * acc[ci:ci + 1, :]

        y_ref[0] = y
        # per-sample partial BN statistics (reduced over batch in the wrapper)
        sum_ref[0] = jnp.sum(y, axis=1, keepdims=True)
        sumsq_ref[0] = jnp.sum(y * y, axis=1, keepdims=True)

    return kernel


# ---------------------------------------------------------------------------
# Kernel 2: apply BatchNorm scale/shift + ReLU (lane-dense elementwise pass)
# ---------------------------------------------------------------------------
def _bn_relu_kernel(y_ref, scale_ref, shift_ref, o_ref):
    o_ref[0] = jnp.maximum(y_ref[0] * scale_ref[...] + shift_ref[...], 0.0)


def _border_masks(H, W):
    rows = jnp.arange(H, dtype=jnp.int32).reshape(H, 1)
    cols = jnp.arange(W, dtype=jnp.int32).reshape(1, W)
    masks = []
    for k in range(9):
        oh, ow = k // 3 - 1, k % 3 - 1
        m = ((rows + oh >= 0) & (rows + oh < H) &
             (cols + ow >= 0) & (cols + ow < W))
        masks.append(m.reshape(H * W))
    return jnp.stack(masks).astype(jnp.float32)          # (9, H*W)


# ---------------------------------------------------------------------------
# Wrapper: NCHW in / NCHW out (matches the PyTorch module)
# ---------------------------------------------------------------------------
def scb_forward(x_nchw, wd_c9, bd_c, wp_oc, bp_c, gamma_c, beta_c, eps=1e-5):
    N, C, H, W = x_nchw.shape
    Cout = wp_oc.shape[0]
    HW = H * W

    # Free, contiguous reshape: puts a lane-dense axis (H*W >= 128) last.
    x = x_nchw.reshape(N, C, HW)
    mask = _border_masks(H, W)
    bd = bd_c.reshape(C, 1)
    bp = bp_c.reshape(Cout, 1)

    cparams = pltpu.CompilerParams(
        dimension_semantics=("parallel",),      # shard batch across TCs on v7x
        vmem_limit_bytes=32 * 1024 * 1024,      # safe on v5e/v6e/v7x
    )

    # TODO(synk): stride>1 and kernels_per_layer>1 (non-default ctor args) not
    # implemented; for very large H*W add a spatial grid axis with halo exchange.
    y, sums, sumsqs = pl.pallas_call(
        _make_fused_dw_pw_kernel(H, W),
        grid=(N,),
        in_specs=[
            pl.BlockSpec((1, C, HW), lambda n: (n, 0, 0)),
            pl.BlockSpec((9, HW), lambda n: (0, 0)),
            pl.BlockSpec((C, 9), lambda n: (0, 0)),
            pl.BlockSpec((C, 1), lambda n: (0, 0)),
            pl.BlockSpec((Cout, C), lambda n: (0, 0)),
            pl.BlockSpec((Cout, 1), lambda n: (0, 0)),
        ],
        out_specs=[
            pl.BlockSpec((1, Cout, HW), lambda n: (n, 0, 0)),
            pl.BlockSpec((1, Cout, 1), lambda n: (n, 0, 0)),
            pl.BlockSpec((1, Cout, 1), lambda n: (n, 0, 0)),
        ],
        out_shape=[
            jax.ShapeDtypeStruct((N, Cout, HW), jnp.float32),
            jax.ShapeDtypeStruct((N, Cout, 1), jnp.float32),
            jax.ShapeDtypeStruct((N, Cout, 1), jnp.float32),
        ],
        compiler_params=cparams,
    )(x, mask, wd_c9, bd, wp_oc, bp)

    # Global training-mode BN statistics (biased variance over N*H*W) -- tiny.
    count = jnp.float32(N * HW)
    mean = jnp.sum(sums[:, :, 0], axis=0) / count
    var = jnp.maximum(jnp.sum(sumsqs[:, :, 0], axis=0) / count - mean * mean, 0.0)
    inv = lax.rsqrt(var + eps)
    scale = (gamma_c * inv).reshape(Cout, 1)
    shift = (beta_c - mean * gamma_c * inv).reshape(Cout, 1)

    out = pl.pallas_call(
        _bn_relu_kernel,
        grid=(N,),
        in_specs=[
            pl.BlockSpec((1, Cout, HW), lambda n: (n, 0, 0)),
            pl.BlockSpec((Cout, 1), lambda n: (0, 0)),
            pl.BlockSpec((Cout, 1), lambda n: (0, 0)),
        ],
        out_specs=pl.BlockSpec((1, Cout, HW), lambda n: (n, 0, 0)),
        out_shape=jax.ShapeDtypeStruct((N, Cout, HW), jnp.float32),
        compiler_params=cparams,
    )(y, scale, shift)

    return out.reshape(N, Cout, H, W)


# ---------------------------------------------------------------------------
# Pure-JAX reference (lax.conv) for correctness checking
# ---------------------------------------------------------------------------
def ref_forward(x, wd_oihw, bd, wp_oihw, bp, gamma, beta):
    Cin = x.shape[1]
    y = lax.conv_general_dilated(
        x, wd_oihw, (1, 1), ((1, 1), (1, 1)),
        feature_group_count=Cin,
        dimension_numbers=("NCHW", "OIHW", "NCHW"))
    y = y + bd.reshape(1, -1, 1, 1)
    y = lax.conv_general_dilated(
        y, wp_oihw, (1, 1), ((0, 0), (0, 0)),
        dimension_numbers=("NCHW", "OIHW", "NCHW"))
    y = y + bp.reshape(1, -1, 1, 1)
    mean = jnp.mean(y, axis=(0, 2, 3), keepdims=True)
    var = jnp.mean((y - mean) ** 2, axis=(0, 2, 3), keepdims=True)
    y = (y - mean) * lax.rsqrt(var + 1e-5)
    y = y * gamma.reshape(1, -1, 1, 1) + beta.reshape(1, -1, 1, 1)
    return jnp.maximum(y, 0.0)


if __name__ == "__main__":
    N, Cin, H, W, Cout = 2, 4, 16, 16, 8

    key = jax.random.PRNGKey(0)
    k1, k2, k3, k4, kx = jax.random.split(key, 5)

    # PyTorch parameter shapes: depthwise (Cin,1,3,3), pointwise (Cout,Cin,1,1);
    # BatchNorm gamma=1, beta=0.
    wd_oihw = jax.random.uniform(k1, (Cin, 1, 3, 3), jnp.float32, -0.3, 0.3)
    bd = jax.random.uniform(k2, (Cin,), jnp.float32, -0.3, 0.3)
    wp_oihw = jax.random.uniform(k3, (Cout, Cin, 1, 1), jnp.float32, -0.5, 0.5)
    bp = jax.random.uniform(k4, (Cout,), jnp.float32, -0.5, 0.5)
    gamma = jnp.ones((Cout,), jnp.float32)
    beta = jnp.zeros((Cout,), jnp.float32)

    x = jax.random.normal(kx, (N, Cin, H, W), jnp.float32)

    # Repack params into kernel-friendly layouts (no data duplication beyond taps).
    wd_c9 = wd_oihw[:, 0].reshape(Cin, 9)        # (Cin, 9)
    wp_oc = wp_oihw[:, :, 0, 0]                  # (Cout, Cin)

    out = jax.block_until_ready(
        scb_forward(x, wd_c9, bd, wp_oc, bp, gamma, beta))

    ref = jax.block_until_ready(
        ref_forward(x, wd_oihw, bd, wp_oihw, bp, gamma, beta))

    assert out.shape == (N, Cout, H, W), out.shape
    err = float(jnp.max(jnp.abs(out - ref)))
    assert jnp.allclose(out, ref, rtol=1e-4, atol=1e-4), err

    print("KERNEL_OK")
</pallas_src>

<mosaic_0001>
module attributes {stable_mosaic.version = 11 : i64} {
  func.func @kernel(%arg0: i32, %arg1: memref<1x4x256xf32, #tpu.memory_space<vmem>>, %arg2: memref<9x256xf32, #tpu.memory_space<vmem>>, %arg3: memref<4x9xf32, #tpu.memory_space<vmem>>, %arg4: memref<4x1xf32, #tpu.memory_space<vmem>>, %arg5: memref<8x4xf32, #tpu.memory_space<vmem>>, %arg6: memref<8x1xf32, #tpu.memory_space<vmem>>, %arg7: memref<1x8x256xf32, #tpu.memory_space<vmem>>, %arg8: memref<1x8x1xf32, #tpu.memory_space<vmem>>, %arg9: memref<1x8x1xf32, #tpu.memory_space<vmem>>) attributes {dimension_semantics = [#tpu.dimension_semantics<parallel>], iteration_bounds = array<i64: 2>, scalar_prefetch = 0 : i64, scratch_operands = 0 : i64, tpu.core_type = #tpu.core_type<tc>, window_params = [{transform_indices = @transform_0, window_bounds = array<i64: 1, 4, 256>}, {pipeline_mode = #tpu.pipeline_mode<synchronous>, transform_indices = @transform_1, window_bounds = array<i64: 9, 256>}, {pipeline_mode = #tpu.pipeline_mode<synchronous>, transform_indices = @transform_2, window_bounds = array<i64: 4, 9>}, {pipeline_mode = #tpu.pipeline_mode<synchronous>, transform_indices = @transform_3, window_bounds = array<i64: 4, 1>}, {pipeline_mode = #tpu.pipeline_mode<synchronous>, transform_indices = @transform_4, window_bounds = array<i64: 8, 4>}, {pipeline_mode = #tpu.pipeline_mode<synchronous>, transform_indices = @transform_5, window_bounds = array<i64: 8, 1>}, {transform_indices = @transform_6, window_bounds = array<i64: 1, 8, 256>}, {transform_indices = @transform_7, window_bounds = array<i64: 1, 8, 1>}, {transform_indices = @transform_8, window_bounds = array<i64: 1, 8, 1>}]} {
    %c0 = arith.constant 0 : index
    %c0_0 = arith.constant 0 : index
    %c0_1 = arith.constant 0 : index
    %0 = vector.load %arg1[%c0, %c0_0, %c0_1] : memref<1x4x256xf32, #tpu.memory_space<vmem>>, vector<1x4x256xf32>
    %1 = vector.shape_cast %0 : vector<1x4x256xf32> to vector<4x256xf32>
    %c0_2 = arith.constant 0 : index
    %c0_3 = arith.constant 0 : index
    %2 = vector.load %arg2[%c0_2, %c0_3] : memref<9x256xf32, #tpu.memory_space<vmem>>, vector<9x256xf32>
    %c0_4 = arith.constant 0 : index
    %c0_5 = arith.constant 0 : index
    %3 = vector.load %arg3[%c0_4, %c0_5] : memref<4x9xf32, #tpu.memory_space<vmem>>, vector<4x9xf32>
    %c0_6 = arith.constant 0 : index
    %c0_7 = arith.constant 0 : index
    %4 = vector.load %arg5[%c0_6, %c0_7] : memref<8x4xf32, #tpu.memory_space<vmem>>, vector<8x4xf32>
    %cst = arith.constant 0.000000e+00 : f32
    %5 = vector.broadcast %cst : f32 to vector<4x256xf32>
    %c17_i32 = arith.constant 17 : i32
    %6 = tpu.dynamic_rotate %1 by %c17_i32 dim 1 : vector<4x256xf32>, i32 -> vector<4x256xf32>
    %7 = vector.extract_strided_slice %2 {offsets = [0, 0], sizes = [1, 256], strides = [1, 1]} : vector<9x256xf32> to vector<1x256xf32>
    %8 = vector.broadcast %7 : vector<1x256xf32> to vector<4x256xf32>
    %9 = arith.mulf %6, %8 : vector<4x256xf32>
    %10 = vector.extract_strided_slice %3 {offsets = [0, 0], sizes = [4, 1], strides = [1, 1]} : vector<4x9xf32> to vector<4x1xf32>
    %11 = vector.broadcast %10 : vector<4x1xf32> to vector<4x256xf32>
    %12 = arith.mulf %9, %11 : vector<4x256xf32>
    %13 = arith.addf %5, %12 : vector<4x256xf32>
    %c16_i32 = arith.constant 16 : i32
    %14 = tpu.dynamic_rotate %1 by %c16_i32 dim 1 : vector<4x256xf32>, i32 -> vector<4x256xf32>
    %15 = vector.extract_strided_slice %2 {offsets = [1, 0], sizes = [1, 256], strides = [1, 1]} : vector<9x256xf32> to vector<1x256xf32>
    %16 = vector.broadcast %15 : vector<1x256xf32> to vector<4x256xf32>
    %17 = arith.mulf %14, %16 : vector<4x256xf32>
    %18 = vector.extract_strided_slice %3 {offsets = [0, 1], sizes = [4, 1], strides = [1, 1]} : vector<4x9xf32> to vector<4x1xf32>
    %19 = vector.broadcast %18 : vector<4x1xf32> to vector<4x256xf32>
    %20 = arith.mulf %17, %19 : vector<4x256xf32>
    %21 = arith.addf %13, %20 : vector<4x256xf32>
    %c15_i32 = arith.constant 15 : i32
    %22 = tpu.dynamic_rotate %1 by %c15_i32 dim 1 : vector<4x256xf32>, i32 -> vector<4x256xf32>
    %23 = vector.extract_strided_slice %2 {offsets = [2, 0], sizes = [1, 256], strides = [1, 1]} : vector<9x256xf32> to vector<1x256xf32>
    %24 = vector.broadcast %23 : vector<1x256xf32> to vector<4x256xf32>
    %25 = arith.mulf %22, %24 : vector<4x256xf32>
    %26 = vector.extract_strided_slice %3 {offsets = [0, 2], sizes = [4, 1], strides = [1, 1]} : vector<4x9xf32> to vector<4x1xf32>
    %27 = vector.broadcast %26 : vector<4x1xf32> to vector<4x256xf32>
    %28 = arith.mulf %25, %27 : vector<4x256xf32>
    %29 = arith.addf %21, %28 : vector<4x256xf32>
    %c1_i32 = arith.constant 1 : i32
    %30 = tpu.dynamic_rotate %1 by %c1_i32 dim 1 : vector<4x256xf32>, i32 -> vector<4x256xf32>
    %31 = vector.extract_strided_slice %2 {offsets = [3, 0], sizes = [1, 256], strides = [1, 1]} : vector<9x256xf32> to vector<1x256xf32>
    %32 = vector.broadcast %31 : vector<1x256xf32> to vector<4x256xf32>
    %33 = arith.mulf %30, %32 : vector<4x256xf32>
    %34 = vector.extract_strided_slice %3 {offsets = [0, 3], sizes = [4, 1], strides = [1, 1]} : vector<4x9xf32> to vector<4x1xf32>
    %35 = vector.broadcast %34 : vector<4x1xf32> to vector<4x256xf32>
    %36 = arith.mulf %33, %35 : vector<4x256xf32>
    %37 = arith.addf %29, %36 : vector<4x256xf32>
    %38 = vector.extract_strided_slice %2 {offsets = [4, 0], sizes = [1, 256], strides = [1, 1]} : vector<9x256xf32> to vector<1x256xf32>
    %39 = vector.broadcast %38 : vector<1x256xf32> to vector<4x256xf32>
    %40 = arith.mulf %1, %39 : vector<4x256xf32>
    %41 = vector.extract_strided_slice %3 {offsets = [0, 4], sizes = [4, 1], strides = [1, 1]} : vector<4x9xf32> to vector<4x1xf32>
    %42 = vector.broadcast %41 : vector<4x1xf32> to vector<4x256xf32>
    %43 = arith.mulf %40, %42 : vector<4x256xf32>
    %44 = arith.addf %37, %43 : vector<4x256xf32>
    %c255_i32 = arith.constant 255 : i32
    %45 = tpu.dynamic_rotate %1 by %c255_i32 dim 1 : vector<4x256xf32>, i32 -> vector<4x256xf32>
    %46 = vector.extract_strided_slice %2 {offsets = [5, 0], sizes = [1, 256], strides = [1, 1]} : vector<9x256xf32> to vector<1x256xf32>
    %47 = vector.broadcast %46 : vector<1x256xf32> to vector<4x256xf32>
    %48 = arith.mulf %45, %47 : vector<4x256xf32>
    %49 = vector.extract_strided_slice %3 {offsets = [0, 5], sizes = [4, 1], strides = [1, 1]} : vector<4x9xf32> to vector<4x1xf32>
    %50 = vector.broadcast %49 : vector<4x1xf32> to vector<4x256xf32>
    %51 = arith.mulf %48, %50 : vector<4x256xf32>
    %52 = arith.addf %44, %51 : vector<4x256xf32>
    %c241_i32 = arith.constant 241 : i32
    %53 = tpu.dynamic_rotate %1 by %c241_i32 dim 1 : vector<4x256xf32>, i32 -> vector<4x256xf32>
    %54 = vector.extract_strided_slice %2 {offsets = [6, 0], sizes = [1, 256], strides = [1, 1]} : vector<9x256xf32> to vector<1x256xf32>
    %55 = vector.broadcast %54 : vector<1x256xf32> to vector<4x256xf32>
    %56 = arith.mulf %53, %55 : vector<4x256xf32>
    %57 = vector.extract_strided_slice %3 {offsets = [0, 6], sizes = [4, 1], strides = [1, 1]} : vector<4x9xf32> to vector<4x1xf32>
    %58 = vector.broadcast %57 : vector<4x1xf32> to vector<4x256xf32>
    %59 = arith.mulf %56, %58 : vector<4x256xf32>
    %60 = arith.addf %52, %59 : vector<4x256xf32>
    %c240_i32 = arith.constant 240 : i32
    %61 = tpu.dynamic_rotate %1 by %c240_i32 dim 1 : vector<4x256xf32>, i32 -> vector<4x256xf32>
    %62 = vector.extract_strided_slice %2 {offsets = [7, 0], sizes = [1, 256], strides = [1, 1]} : vector<9x256xf32> to vector<1x256xf32>
    %63 = vector.broadcast %62 : vector<1x256xf32> to vector<4x256xf32>
    %64 = arith.mulf %61, %63 : vector<4x256xf32>
    %65 = vector.extract_strided_slice %3 {offsets = [0, 7], sizes = [4, 1], strides = [1, 1]} : vector<4x9xf32> to vector<4x1xf32>
    %66 = vector.broadcast %65 : vector<4x1xf32> to vector<4x256xf32>
    %67 = arith.mulf %64, %66 : vector<4x256xf32>
    %68 = arith.addf %60, %67 : vector<4x256xf32>
    %c239_i32 = arith.constant 239 : i32
    %69 = tpu.dynamic_rotate %1 by %c239_i32 dim 1 : vector<4x256xf32>, i32 -> vector<4x256xf32>
    %70 = vector.extract_strided_slice %2 {offsets = [8, 0], sizes = [1, 256], strides = [1, 1]} : vector<9x256xf32> to vector<1x256xf32>
    %71 = vector.broadcast %70 : vector<1x256xf32> to vector<4x256xf32>
    %72 = arith.mulf %69, %71 : vector<4x256xf32>
    %73 = vector.extract_strided_slice %3 {offsets = [0, 8], sizes = [4, 1], strides = [1, 1]} : vector<4x9xf32> to vector<4x1xf32>
    %74 = vector.broadcast %73 : vector<4x1xf32> to vector<4x256xf32>
    %75 = arith.mulf %72, %74 : vector<4x256xf32>
    %76 = arith.addf %68, %75 : vector<4x256xf32>
    %c0_8 = arith.constant 0 : index
    %c0_9 = arith.constant 0 : index
    %77 = vector.load %arg4[%c0_8, %c0_9] : memref<4x1xf32, #tpu.memory_space<vmem>>, vector<4x1xf32>
    %78 = vector.broadcast %77 : vector<4x1xf32> to vector<4x256xf32>
    %79 = arith.addf %76, %78 : vector<4x256xf32>
    %cst_10 = arith.constant 0.000000e+00 : f32
    %80 = vector.broadcast %cst_10 : f32 to vector<8x256xf32>
    %c0_11 = arith.constant 0 : index
    %c0_12 = arith.constant 0 : index
    %81 = vector.load %arg6[%c0_11, %c0_12] : memref<8x1xf32, #tpu.memory_space<vmem>>, vector<8x1xf32>
    %82 = vector.broadcast %81 : vector<8x1xf32> to vector<8x256xf32>
    %83 = arith.addf %80, %82 : vector<8x256xf32>
    %84 = vector.extract_strided_slice %4 {offsets = [0, 0], sizes = [8, 1], strides = [1, 1]} : vector<8x4xf32> to vector<8x1xf32>
    %85 = vector.extract_strided_slice %79 {offsets = [0, 0], sizes = [1, 256], strides = [1, 1]} : vector<4x256xf32> to vector<1x256xf32>
    %86 = vector.broadcast %84 : vector<8x1xf32> to vector<8x256xf32>
    %87 = vector.broadcast %85 : vector<1x256xf32> to vector<8x256xf32>
    %88 = arith.mulf %86, %87 : vector<8x256xf32>
    %89 = arith.addf %83, %88 : vector<8x256xf32>
    %90 = vector.extract_strided_slice %4 {offsets = [0, 1], sizes = [8, 1], strides = [1, 1]} : vector<8x4xf32> to vector<8x1xf32>
    %91 = vector.extract_strided_slice %79 {offsets = [1, 0], sizes = [1, 256], strides = [1, 1]} : vector<4x256xf32> to vector<1x256xf32>
    %92 = vector.broadcast %90 : vector<8x1xf32> to vector<8x256xf32>
    %93 = vector.broadcast %91 : vector<1x256xf32> to vector<8x256xf32>
    %94 = arith.mulf %92, %93 : vector<8x256xf32>
    %95 = arith.addf %89, %94 : vector<8x256xf32>
    %96 = vector.extract_strided_slice %4 {offsets = [0, 2], sizes = [8, 1], strides = [1, 1]} : vector<8x4xf32> to vector<8x1xf32>
    %97 = vector.extract_strided_slice %79 {offsets = [2, 0], sizes = [1, 256], strides = [1, 1]} : vector<4x256xf32> to vector<1x256xf32>
    %98 = vector.broadcast %96 : vector<8x1xf32> to vector<8x256xf32>
    %99 = vector.broadcast %97 : vector<1x256xf32> to vector<8x256xf32>
    %100 = arith.mulf %98, %99 : vector<8x256xf32>
    %101 = arith.addf %95, %100 : vector<8x256xf32>
    %102 = vector.extract_strided_slice %4 {offsets = [0, 3], sizes = [8, 1], strides = [1, 1]} : vector<8x4xf32> to vector<8x1xf32>
    %103 = vector.extract_strided_slice %79 {offsets = [3, 0], sizes = [1, 256], strides = [1, 1]} : vector<4x256xf32> to vector<1x256xf32>
    %104 = vector.broadcast %102 : vector<8x1xf32> to vector<8x256xf32>
    %105 = vector.broadcast %103 : vector<1x256xf32> to vector<8x256xf32>
    %106 = arith.mulf %104, %105 : vector<8x256xf32>
    %107 = arith.addf %101, %106 : vector<8x256xf32>
    %c0_13 = arith.constant 0 : index
    %c0_14 = arith.constant 0 : index
    %c0_15 = arith.constant 0 : index
    %108 = vector.load %arg7[%c0_13, %c0_14, %c0_15] : memref<1x8x256xf32, #tpu.memory_space<vmem>>, vector<1x8x256xf32>
    %109 = vector.shape_cast %108 : vector<1x8x256xf32> to vector<8x256xf32>
    %110 = vector.shape_cast %107 : vector<8x256xf32> to vector<1x8x256xf32>
    tpu.vector_store %arg7[%c0_13, %c0_14, %c0_15], %110 {strides = array<i32>} : memref<1x8x256xf32, #tpu.memory_space<vmem>>, vector<1x8x256xf32>,
    %cst_16 = arith.constant dense<0.000000e+00> : vector<8xf32>
    %111 = vector.multi_reduction <add>, %107, %cst_16 [1] : vector<8x256xf32> to vector<8xf32>
    %112 = vector.shape_cast %111 : vector<8xf32> to vector<8x1xf32>
    %c0_17 = arith.constant 0 : index
    %c0_18 = arith.constant 0 : index
    %c0_19 = arith.constant 0 : index
    %113 = vector.load %arg8[%c0_17, %c0_18, %c0_19] : memref<1x8x1xf32, #tpu.memory_space<vmem>>, vector<1x8x1xf32>
    %114 = vector.shape_cast %113 : vector<1x8x1xf32> to vector<8x1xf32>
    %115 = vector.shape_cast %112 : vector<8x1xf32> to vector<1x8x1xf32>
    tpu.vector_store %arg8[%c0_17, %c0_18, %c0_19], %115 {strides = array<i32>} : memref<1x8x1xf32, #tpu.memory_space<vmem>>, vector<1x8x1xf32>,
    %116 = arith.mulf %107, %107 : vector<8x256xf32>
    %cst_20 = arith.constant dense<0.000000e+00> : vector<8xf32>
    %117 = vector.multi_reduction <add>, %116, %cst_20 [1] : vector<8x256xf32> to vector<8xf32>
    %118 = vector.shape_cast %117 : vector<8xf32> to vector<8x1xf32>
    %c0_21 = arith.constant 0 : index
    %c0_22 = arith.constant 0 : index
    %c0_23 = arith.constant 0 : index
    %119 = vector.load %arg9[%c0_21, %c0_22, %c0_23] : memref<1x8x1xf32, #tpu.memory_space<vmem>>, vector<1x8x1xf32>
    %120 = vector.shape_cast %119 : vector<1x8x1xf32> to vector<8x1xf32>
    %121 = vector.shape_cast %118 : vector<8x1xf32> to vector<1x8x1xf32>
    tpu.vector_store %arg9[%c0_21, %c0_22, %c0_23], %121 {strides = array<i32>} : memref<1x8x1xf32, #tpu.memory_space<vmem>>, vector<1x8x1xf32>,
    return
  }
  func.func @transform_0(%arg0: i32) -> (i32, i32, i32) {
    %c0_i32 = arith.constant 0 : i32
    %c0_i32_0 = arith.constant 0 : i32
    %c0_i32_1 = arith.constant 0 : i32
    return %arg0, %c0_i32, %c0_i32_0 : i32, i32, i32
  }
  func.func @transform_1(%arg0: i32) -> (i32, i32) {
    %c0_i32 = arith.constant 0 : i32
    %c0_i32_0 = arith.constant 0 : i32
    %c0_i32_1 = arith.constant 0 : i32
    return %c0_i32, %c0_i32_0 : i32, i32
  }
  func.func @transform_2(%arg0: i32) -> (i32, i32) {
    %c0_i32 = arith.constant 0 : i32
    %c0_i32_0 = arith.constant 0 : i32
    %c0_i32_1 = arith.constant 0 : i32
    return %c0_i32, %c0_i32_0 : i32, i32
  }
  func.func @transform_3(%arg0: i32) -> (i32, i32) {
    %c0_i32 = arith.constant 0 : i32
    %c0_i32_0 = arith.constant 0 : i32
    %c0_i32_1 = arith.constant 0 : i32
    return %c0_i32, %c0_i32_0 : i32, i32
  }
  func.func @transform_4(%arg0: i32) -> (i32, i32) {
    %c0_i32 = arith.constant 0 : i32
    %c0_i32_0 = arith.constant 0 : i32
    %c0_i32_1 = arith.constant 0 : i32
    return %c0_i32, %c0_i32_0 : i32, i32
  }
  func.func @transform_5(%arg0: i32) -> (i32, i32) {
    %c0_i32 = arith.constant 0 : i32
    %c0_i32_0 = arith.constant 0 : i32
    %c0_i32_1 = arith.constant 0 : i32
    return %c0_i32, %c0_i32_0 : i32, i32
  }
  func.func @transform_6(%arg0: i32) -> (i32, i32, i32) {
    %c0_i32 = arith.constant 0 : i32
    %c0_i32_0 = arith.constant 0 : i32
    %c0_i32_1 = arith.constant 0 : i32
    return %arg0, %c0_i32, %c0_i32_0 : i32, i32, i32
  }
  func.func @transform_7(%arg0: i32) -> (i32, i32, i32) {
    %c0_i32 = arith.constant 0 : i32
    %c0_i32_0 = arith.constant 0 : i32
    %c0_i32_1 = arith.constant 0 : i32
    return %arg0, %c0_i32, %c0_i32_0 : i32, i32, i32
  }
  func.func @transform_8(%arg0: i32) -> (i32, i32, i32) {
    %c0_i32 = arith.constant 0 : i32
    %c0_i32_0 = arith.constant 0 : i32
    %c0_i32_1 = arith.constant 0 : i32
    return %arg0, %c0_i32, %c0_i32_0 : i32, i32, i32
  }
}

</mosaic_0001>

<llo_original>
// kernel: tpu_custom_call.1
$region0: #{tpu_custom_call.1}
  #allocation0 [shape = 'u32[]', space=smem, size = 0x4, offset = 0x4, fixed_abs, tag = 'smem constant byte address 0x4 - core index']
  #allocation1 [shape = 'u32[72,128]{1,0:T(1,128)}', space=vmem, size = 0x9000, scoped, tag = 'internal scratch']
  %s0 = inlined_call_operand.vmem [shape: f32[2,4,256], index: 0, kind: input, shape index: {}]
  %s1 = inlined_call_operand.hbm [shape: f32[9,256], index: 1, kind: input, shape index: {}]
  %s2 = inlined_call_operand.vmem [shape: f32[4,9], index: 2, kind: input, shape index: {}]
  %s3 = inlined_call_operand.vmem [shape: f32[4,1], index: 3, kind: input, shape index: {}]
  %s4 = inlined_call_operand.vmem [shape: f32[8,4], index: 4, kind: input, shape index: {}]
  %s5 = inlined_call_operand.vmem [shape: f32[8,1], index: 5, kind: input, shape index: {}]
  %s6 = inlined_call_operand.hbm [shape: f32[2,8,256], index: 6, kind: output, shape index: {0}]
  %s7 = inlined_call_operand.vmem [shape: f32[2,8,1], index: 7, kind: output, shape index: {1}]
  %s8 = inlined_call_operand.vmem [shape: f32[2,8,1], index: 8, kind: output, shape index: {2}]
  %9 = xla_tuple %s6, %s7, %s8
  %s10 = sld [smem:[#allocation0]]
  $region77: #{tpu_custom_call.1} parent=0
    _
  %s12 = ssub.s32 1, %s10
  %s13 = scalar_select 0, %s12, %s10
  $region1: #{tpu_custom_call.1} parent=0
    #allocation2 [shape = 'u8[16384]{0}', space=vmem, size = 0x4000, scoped, tag = 'input window, operand 1, single buffered']
    #allocation3 [shape = 's32[2]{0}', space=sflag, size = 0x8, scoped, tag = 'scoped memory for tpu_custom_call.1']
    #allocation4 [shape = 's32[2]{0}', space=sflag, size = 0x8, scoped, tag = 'scoped memory for tpu_custom_call.1']
    #allocation5 [shape = 'u8[16384]{0}', space=vmem, size = 0x4000, scoped, tag = 'output window, operand 0']
    %14 = vsyncpa [#allocation3], 0
    %15 = vsyncpa [#allocation4], 0
    %s16 = scalar_lea.sflag [#allocation4], 1
    %17 = vsyncpa %s16, 0
    loop: start=0, step=1, limit=4
    $region2: #{tpu_custom_call.1} parent=1 // loop_pre_header
      _
    $region3: #{tpu_custom_call.1} parent=1 // loop_header
      %s19 = sphi 0, %s23
      %p20 = scmp.ge.s32.totalorder %s19, 4
      %s29 = sphi 0, %s31
      %s32 = sphi 0, %s29
      %s33 = sphi 0, %s32
      %s49 = sphi 0, %s33
      %s53 = sphi 0, %s53
      %s55 = sphi 0, %s53
      %s56 = sphi 0, %s55
      %s70 = sphi 0, %s56
      %s74 = sphi 0, %s74
      %s76 = sphi 0, %s74
      %s77 = sphi 0, %s76
      %s91 = sphi 0, %s77
      %s95 = sphi 0, %s95
      %s97 = sphi 0, %s95
      %s98 = sphi 0, %s97
      %s112 = sphi 0, %s98
      %s116 = sphi 0, %s116
      %s118 = sphi 0, %s116
      %s119 = sphi 0, %s118
      %s133 = sphi 0, %s119
      %s137 = sphi 0, %s137
      %s139 = sphi 0, %s137
      %s140 = sphi 0, %s139
      %s154 = sphi 0, %s140
      %s160 = sphi 0, %s162
      %s163 = sphi 0, %s160
      %s164 = sphi 0, %s163
      %s180 = sphi 0, %s164
      %s186 = sphi 0, %s188
      %s189 = sphi 0, %s186
      %s190 = sphi 0, %s189
      %s206 = sphi 0, %s190
      %s212 = sphi 0, %s214
      %s215 = sphi 0, %s212
      %s216 = sphi 0, %s215
      %s232 = sphi 0, %s216
    $region4: #{tpu_custom_call.1} parent=1 // loop_header_branch
      %22 = sbr.rel (%p20) target = $region8
    $region5: #{tpu_custom_call.1} parent=1 // loop_body
      %s24 = ssub.s32 %s19, 1
      %s25 = ssub.s32 %s19, 2
      %s26 = sadd.s32 %s19, 1
      %s27 = ssub.s32 %s19, %s26
      %p28 = scmp.eq.s32.totalorder %s27, 0
      %s30 = sadd.s32 %s29, 1
      %s31 = scalar_select %p28, %s29, %s30
      %p34 = pneg %p28
      %p35 = scmp.eq.s32.totalorder %s19, 1
      %p36 = por %p34, %p35
      %p37 = scmp.ne.s32.totalorder %s29, %s32
      %p38 = scmp.eq.s32.totalorder %s19, 0
      %p39 = por %p37, %p38
      %p40 = scmp.ne.s32.totalorder %s29, %s32
      %p41 = scmp.eq.s32.totalorder %s24, 1
      %p42 = por %p40, %p41
      %p43 = scmp.ne.s32.totalorder %s32, %s33
      %p44 = scmp.eq.s32.totalorder %s24, 0
      %p45 = por %p43, %p44
      %p46 = scmp.ne.s32.totalorder %s32, %s33
      %p47 = scmp.eq.s32.totalorder %s25, 1
      %p48 = por %p46, %p47
      %p50 = scmp.ne.s32.totalorder %s33, %s49
      %p51 = scmp.eq.s32.totalorder %s25, 0
      %p52 = por %p50, %p51
      %s54 = sadd.s32 %s53, 1
      %p57 = scmp.eq.s32.totalorder %s19, 1
      %p58 = scmp.ne.s32.totalorder %s53, %s55
      %p59 = scmp.eq.s32.totalorder %s19, 0
      %p60 = por %p58, %p59
      %p61 = scmp.ne.s32.totalorder %s53, %s55
      %p62 = scmp.eq.s32.totalorder %s24, 1
      %p63 = por %p61, %p62
      %p64 = scmp.ne.s32.totalorder %s55, %s56
      %p65 = scmp.eq.s32.totalorder %s24, 0
      %p66 = por %p64, %p65
      %p67 = scmp.ne.s32.totalorder %s55, %s56
      %p68 = scmp.eq.s32.totalorder %s25, 1
      %p69 = por %p67, %p68
      %p71 = scmp.ne.s32.totalorder %s56, %s70
      %p72 = scmp.eq.s32.totalorder %s25, 0
      %p73 = por %p71, %p72
      %s75 = sadd.s32 %s74, 1
      %p78 = scmp.eq.s32.totalorder %s19, 1
      %p79 = scmp.ne.s32.totalorder %s74, %s76
      %p80 = scmp.eq.s32.totalorder %s19, 0
      %p81 = por %p79, %p80
      %p82 = scmp.ne.s32.totalorder %s74, %s76
      %p83 = scmp.eq.s32.totalorder %s24, 1
      %p84 = por %p82, %p83
      %p85 = scmp.ne.s32.totalorder %s76, %s77
      %p86 = scmp.eq.s32.totalorder %s24, 0
      %p87 = por %p85, %p86
      %p88 = scmp.ne.s32.totalorder %s76, %s77
      %p89 = scmp.eq.s32.totalorder %s25, 1
      %p90 = por %p88, %p89
      %p92 = scmp.ne.s32.totalorder %s77, %s91
      %p93 = scmp.eq.s32.totalorder %s25, 0
      %p94 = por %p92, %p93
      %s96 = sadd.s32 %s95, 1
      %p99 = scmp.eq.s32.totalorder %s19, 1
      %p100 = scmp.ne.s32.totalorder %s95, %s97
      %p101 = scmp.eq.s32.totalorder %s19, 0
      %p102 = por %p100, %p101
      %p103 = scmp.ne.s32.totalorder %s95, %s97
      %p104 = scmp.eq.s32.totalorder %s24, 1
      %p105 = por %p103, %p104
      %p106 = scmp.ne.s32.totalorder %s97, %s98
      %p107 = scmp.eq.s32.totalorder %s24, 0
      %p108 = por %p106, %p107
      %p109 = scmp.ne.s32.totalorder %s97, %s98
      %p110 = scmp.eq.s32.totalorder %s25, 1
      %p111 = por %p109, %p110
      %p113 = scmp.ne.s32.totalorder %s98, %s112
      %p114 = scmp.eq.s32.totalorder %s25, 0
      %p115 = por %p113, %p114
      %s117 = sadd.s32 %s116, 1
      %p120 = scmp.eq.s32.totalorder %s19, 1
      %p121 = scmp.ne.s32.totalorder %s116, %s118
      %p122 = scmp.eq.s32.totalorder %s19, 0
      %p123 = por %p121, %p122
      %p124 = scmp.ne.s32.totalorder %s116, %s118
      %p125 = scmp.eq.s32.totalorder %s24, 1
      %p126 = por %p124, %p125
      %p127 = scmp.ne.s32.totalorder %s118, %s119
      %p128 = scmp.eq.s32.totalorder %s24, 0
      %p129 = por %p127, %p128
      %p130 = scmp.ne.s32.totalorder %s118, %s119
      %p131 = scmp.eq.s32.totalorder %s25, 1
      %p132 = por %p130, %p131
      %p134 = scmp.ne.s32.totalorder %s119, %s133
      %p135 = scmp.eq.s32.totalorder %s25, 0
      %p136 = por %p134, %p135
      %s138 = sadd.s32 %s137, 1
      %p141 = scmp.eq.s32.totalorder %s19, 1
      %p142 = scmp.ne.s32.totalorder %s137, %s139
      %p143 = scmp.eq.s32.totalorder %s19, 0
      %p144 = por %p142, %p143
      %p145 = scmp.ne.s32.totalorder %s137, %s139
      %p146 = scmp.eq.s32.totalorder %s24, 1
      %p147 = por %p145, %p146
      %p148 = scmp.ne.s32.totalorder %s139, %s140
      %p149 = scmp.eq.s32.totalorder %s24, 0
      %p150 = por %p148, %p149
      %p151 = scmp.ne.s32.totalorder %s139, %s140
      %p152 = scmp.eq.s32.totalorder %s25, 1
      %p153 = por %p151, %p152
      %p155 = scmp.ne.s32.totalorder %s140, %s154
      %p156 = scmp.eq.s32.totalorder %s25, 0
      %p157 = por %p155, %p156
      %s158 = ssub.s32 %s19, %s26
      %p159 = scmp.eq.s32.totalorder %s158, 0
      %s161 = sadd.s32 %s160, 1
      %s162 = scalar_select %p159, %s160, %s161
      %p165 = pneg %p159
      %p166 = scmp.eq.s32.totalorder %s19, 1
      %p167 = por %p165, %p166
      %p168 = scmp.ne.s32.totalorder %s160, %s163
      %p169 = scmp.eq.s32.totalorder %s19, 0
      %p170 = por %p168, %p169
      %p171 = scmp.ne.s32.totalorder %s160, %s163
      %p172 = scmp.eq.s32.totalorder %s24, 1
      %p173 = por %p171, %p172
      %p174 = scmp.ne.s32.totalorder %s163, %s164
      %p175 = scmp.eq.s32.totalorder %s24, 0
      %p176 = por %p174, %p175
      %p177 = scmp.ne.s32.totalorder %s163, %s164
      %p178 = scmp.eq.s32.totalorder %s25, 1
      %p179 = por %p177, %p178
      %p181 = scmp.ne.s32.totalorder %s164, %s180
      %p182 = scmp.eq.s32.totalorder %s25, 0
      %p183 = por %p181, %p182
      %s184 = ssub.s32 %s19, %s26
      %p185 = scmp.eq.s32.totalorder %s184, 0
      %s187 = sadd.s32 %s186, 1
      %s188 = scalar_select %p185, %s186, %s187
      %p191 = pneg %p185
      %p192 = scmp.eq.s32.totalorder %s19, 1
      %p193 = por %p191, %p192
      %p194 = scmp.ne.s32.totalorder %s186, %s189
      %p195 = scmp.eq.s32.totalorder %s19, 0
      %p196 = por %p194, %p195
      %p197 = scmp.ne.s32.totalorder %s186, %s189
      %p198 = scmp.eq.s32.totalorder %s24, 1
      %p199 = por %p197, %p198
      %p200 = scmp.ne.s32.totalorder %s189, %s190
      %p201 = scmp.eq.s32.totalorder %s24, 0
      %p202 = por %p200, %p201
      %p203 = scmp.ne.s32.totalorder %s189, %s190
      %p204 = scmp.eq.s32.totalorder %s25, 1
      %p205 = por %p203, %p204
      %p207 = scmp.ne.s32.totalorder %s190, %s206
      %p208 = scmp.eq.s32.totalorder %s25, 0
      %p209 = por %p207, %p208
      %s210 = ssub.s32 %s19, %s26
      %p211 = scmp.eq.s32.totalorder %s210, 0
      %s213 = sadd.s32 %s212, 1
      %s214 = scalar_select %p211, %s212, %s213
      %p217 = pneg %p211
      %p218 = scmp.eq.s32.totalorder %s19, 1
      %p219 = por %p217, %p218
      %p220 = scmp.ne.s32.totalorder %s212, %s215
      %p221 = scmp.eq.s32.totalorder %s19, 0
      %p222 = por %p220, %p221
      %p223 = scmp.ne.s32.totalorder %s212, %s215
      %p224 = scmp.eq.s32.totalorder %s24, 1
      %p225 = por %p223, %p224
      %p226 = scmp.ne.s32.totalorder %s215, %s216
      %p227 = scmp.eq.s32.totalorder %s24, 0
      %p228 = por %p226, %p227
      %p229 = scmp.ne.s32.totalorder %s215, %s216
      %p230 = scmp.eq.s32.totalorder %s25, 1
      %p231 = por %p229, %p230
      %p233 = scmp.ne.s32.totalorder %s216, %s232
      %p234 = scmp.eq.s32.totalorder %s25, 0
      %p235 = por %p233, %p234
      %p236 = scmp.le.s32.totalorder 1, %s19
      %p237 = scmp.lt.s32.totalorder %s19, 3
      %p238 = pnand %p236, %p237
      %p239 = pneg %p238
      // Predicated region
      $region9: #{tpu_custom_call.1} parent=5 // pred_check
        _
      $region10: #{tpu_custom_call.1} parent=5 // pred_check_branch
        %241 = sbr.rel (%p238) target = $region12
      $region11: #{tpu_custom_call.1} parent=5 // pred_region
        %s242 = ssub.s32 %s19, 1
        // Predicated region
        $region13: #{tpu_custom_call.1} parent=11 // pred_check
          %p243 = pneg %p66
        $region14: #{tpu_custom_call.1} parent=11 // pred_check_branch
          %245 = sbr.rel (%p243) target = $region16
        $region15: #{tpu_custom_call.1} parent=11 // pred_region
          %247 = vsyncadd [#allocation3], 0
          %s248 = sshll.u32 %s1, 4
          %s249 = int_to_ptr.hbm [resolvable:$true] %s248
          %s250 = sshll.u32 [#allocation2], 4
          %s251 = int_to_ptr.vmem [resolvable:$true] %s250
          %256 = dma.hbm_to_vmem [thread:$0]  %s249, 512, %s251, [#allocation3], 256, 256, 16
        $region16: #{tpu_custom_call.1} parent=11 // pred_fallthru
          _
        // Predicated region
        $region17: #{tpu_custom_call.1} parent=11 // pred_check
          %p257 = pneg %p87
        $region18: #{tpu_custom_call.1} parent=11 // pred_check_branch
          %259 = sbr.rel (%p257) target = $region20
        $region19: #{tpu_custom_call.1} parent=11 // pred_region
          _
        $region20: #{tpu_custom_call.1} parent=11 // pred_fallthru
          _
        // Predicated region
        $region21: #{tpu_custom_call.1} parent=11 // pred_check
          %p260 = pneg %p108
        $region22: #{tpu_custom_call.1} parent=11 // pred_check_branch
          %262 = sbr.rel (%p260) target = $region24
        $region23: #{tpu_custom_call.1} parent=11 // pred_region
          _
        $region24: #{tpu_custom_call.1} parent=11 // pred_fallthru
          _
        // Predicated region
        $region25: #{tpu_custom_call.1} parent=11 // pred_check
          %p263 = pneg %p129
        $region26: #{tpu_custom_call.1} parent=11 // pred_check_branch
          %265 = sbr.rel (%p263) target = $region28
        $region27: #{tpu_custom_call.1} parent=11 // pred_region
          _
        $region28: #{tpu_custom_call.1} parent=11 // pred_fallthru
          _
        // Predicated region
        $region29: #{tpu_custom_call.1} parent=11 // pred_check
          %p266 = pneg %p150
        $region30: #{tpu_custom_call.1} parent=11 // pred_check_branch
          %268 = sbr.rel (%p266) target = $region32
        $region31: #{tpu_custom_call.1} parent=11 // pred_region
          _
        $region32: #{tpu_custom_call.1} parent=11 // pred_fallthru
          _
      $region12: #{tpu_custom_call.1} parent=5 // pred_fallthru
        _
      %p269 = scmp.lt.s32.totalorder %s19, 2
      // Predicated region
      $region33: #{tpu_custom_call.1} parent=5 // pred_check
        %p270 = pneg %p269
      $region34: #{tpu_custom_call.1} parent=5 // pred_check_branch
        %272 = sbr.rel (%p270) target = $region36
      $region35: #{tpu_custom_call.1} parent=5 // pred_region
        // Predicated region
        $region37: #{tpu_custom_call.1} parent=35 // pred_check
          %p273 = pneg %p39
        $region38: #{tpu_custom_call.1} parent=35 // pred_check_branch
          %275 = sbr.rel (%p273) target = $region40
        $region39: #{tpu_custom_call.1} parent=35 // pred_region
          %p276 = scmp.lt.s32.totalorder %s19, 1
          %s277 = scalar_select %p276, %s19, 1
          %s278 = smul.addr %s277, 2
          %s279 = smul.addr %s278, 4
          %s280 = scalar_lea.vmem %s0, %s279
        $region40: #{tpu_custom_call.1} parent=35 // pred_fallthru
          _
      $region36: #{tpu_custom_call.1} parent=5 // pred_fallthru
        _
      %p281 = scmp.le.s32.totalorder 1, %s19
      %p282 = scmp.lt.s32.totalorder %s19, 3
      %p283 = pnand %p281, %p282
      %p284 = pneg %p283
      // Predicated region
      $region41: #{tpu_custom_call.1} parent=5 // pred_check
        _
      $region42: #{tpu_custom_call.1} parent=5 // pred_check_branch
        %286 = sbr.rel (%p283) target = $region44
      $region43: #{tpu_custom_call.1} parent=5 // pred_region
        %s287 = ssub.s32 %s19, 1
        // Predicated region
        $region45: #{tpu_custom_call.1} parent=43 // pred_check
          %p288 = pneg %p66
        $region46: #{tpu_custom_call.1} parent=43 // pred_check_branch
          %290 = sbr.rel (%p288) target = $region48
        $region47: #{tpu_custom_call.1} parent=43 // pred_region
          %292 = dma.done [#allocation3], 512
        $region48: #{tpu_custom_call.1} parent=43 // pred_fallthru
          _
        %p293 = scmp.lt.s32.totalorder %s24, 1
        %s294 = scalar_select %p293, %s24, 1
        %s295 = smul.addr %s294, 2
        %s296 = smul.addr %s295, 4
        %s297 = scalar_lea.vmem %s0, %s296
        %p298 = pneg %p45
        %p299 = pneg %p42
        %p300 = pneg %p66
        %p301 = pneg %p63
        %p302 = pneg %p87
        %p303 = pneg %p84
        %p304 = pneg %p108
        %p305 = pneg %p105
        %p306 = pneg %p129
        %p307 = pneg %p126
        %p308 = pneg %p150
        %p309 = pneg %p147
        %p310 = pneg %p176
        %p311 = pneg %p173
        %s312 = sand.u32 %s163, 1
        %s313 = scalar_lea.sflag [#allocation4], %s312
        %s314 = sand.u32 %s163, 1
        %s315 = smul.addr %s314, 16
        %s316 = scalar_lea.vmem [#allocation5], %s315
        %p317 = pneg %p202
        %p318 = pneg %p199
        %p319 = scmp.lt.s32.totalorder %s24, 1
        %s320 = scalar_select %p319, %s24, 1
        %s321 = smul.addr %s320, 8
        %s322 = scalar_lea.vmem %s7, %s321
        %p323 = pneg %p228
        %p324 = pneg %p225
        %p325 = scmp.lt.s32.totalorder %s24, 1
        %s326 = scalar_select %p325, %s24, 1
        %s327 = smul.addr %s326, 8
        %s328 = scalar_lea.vmem %s8, %s327
        %p329 = scmp.lt.s32.totalorder %s24, 1
        %s330 = scalar_select %p329, %s24, 1
        %s331 = smul.addr %s330, 2
        %s332 = smul.addr %s331, 4
        %s333 = scalar_lea.vmem %s0, %s332
        %p334 = scmp.lt.s32.totalorder %s24, 1
        %s335 = scalar_select %p334, %s24, 1
        %s336 = smul.addr %s335, 8
        %s337 = scalar_lea.vmem %s7, %s336
        %p338 = scmp.lt.s32.totalorder %s24, 1
        %s339 = scalar_select %p338, %s24, 1
        %s340 = smul.addr %s339, 8
        %s341 = scalar_lea.vmem %s8, %s340
        %v342 = vld [vmem:[%s333] sm:$0xff]
        %v343 = vld [vmem:[#allocation2] sm:$0xff]
        %v344 = vld [vmem:[#allocation2 + $0x8] sm:$0xff]
        %v345 = vld [vmem:[#allocation2 + $0x10] sm:$0x1]
        %v346 = vld [vmem:[#allocation2 + $0x18] sm:$0x1]
        %v347 = vld [vmem:[%s2] sm:$0xf]
        %v348 = vld [vmem:[%s4] sm:$0xff]
        %350 = vst [vmem:[#allocation1] ss:$2 sm:$0xff] %v342
        %v351 = vld.sshfl [vmem:[#allocation1] sm:$0xff pattern:$0x75316420]
        %v352 = vld.sshfl [vmem:[#allocation1 + $0x8] sm:$0xff pattern:$0x75316420]
        %355 = vrot.lane.b32.xlu0 %v351, 17
        %v356 = vpop.permute.xlu0 %355
        %357 = vrot.lane.b32.xlu0 %v352, 17
        %v358 = vpop.permute.xlu0 %357
        %v359 = vlaneseq
        %v360 = vand.u32 %v359, 127
        %vm361 = vcmp.lt.s32.totalorder %v360, 17
        %v362 = vsel %vm361, %v356, %v358
        %v363 = vsel %vm361, %v358, %v356
        %v364 = vperm.slane %v343, 0
        %v365 = vperm.slane %v344, 0
        %v366 = vmul.f32 %v363, %v364
        %v367 = vmul.f32 %v362, %v365
        %369 = vset.pattern.permute.xlu0 0
        %370 = vperm.xlu0 %369, %v347
        %v371 = vpop.permute.xlu0 %370
        %v373 = vmul.f32 %v366, %v371
        %v374 = vmul.f32 %v367, %v371
        %v375 = vadd.f32 %v373, 0.0
        %v376 = vadd.f32 %v374, 0.0
        %377 = vst [vmem:[#allocation1] ss:$2 sm:$0xff] %v342
        %v378 = vld.sshfl [vmem:[#allocation1] sm:$0xff pattern:$0x75316420]
        %v379 = vld.sshfl [vmem:[#allocation1 + $0x8] sm:$0xff pattern:$0x75316420]
        %382 = vrot.lane.b32.xlu0 %v378, 16
        %v383 = vpop.permute.xlu0 %382
        %384 = vrot.lane.b32.xlu0 %v379, 16
        %v385 = vpop.permute.xlu0 %384
        %vm386 = vcmp.lt.s32.totalorder %v360, 16
        %v387 = vsel %vm386, %v383, %v385
        %v388 = vsel %vm386, %v385, %v383
        %v389 = vperm.slane %v343, 1
        %v390 = vperm.slane %v344, 1
        %v391 = vmul.f32 %v388, %v389
        %v392 = vmul.f32 %v387, %v390
        %393 = vset.pattern.permute.xlu0 1
        %394 = vperm.xlu0 %393, %v347
        %v395 = vpop.permute.xlu0 %394
        %v397 = vmul.f32 %v391, %v395
        %v398 = vmul.f32 %v392, %v395
        %v399 = vadd.f32 %v375, %v397
        %v400 = vadd.f32 %v376, %v398
        %401 = vst [vmem:[#allocation1] ss:$2 sm:$0xff] %v342
        %v402 = vld.sshfl [vmem:[#allocation1] sm:$0xff pattern:$0x75316420]
        %v403 = vld.sshfl [vmem:[#allocation1 + $0x8] sm:$0xff pattern:$0x75316420]
        %406 = vrot.lane.b32.xlu0 %v402, 15
        %v407 = vpop.permute.xlu0 %406
        %408 = vrot.lane.b32.xlu0 %v403, 15
        %v409 = vpop.permute.xlu0 %408
        %vm410 = vcmp.lt.s32.totalorder %v360, 15
        %v411 = vsel %vm410, %v407, %v409
        %v412 = vsel %vm410, %v409, %v407
        %v413 = vperm.slane %v343, 2
        %v414 = vperm.slane %v344, 2
        %v415 = vmul.f32 %v412, %v413
        %v416 = vmul.f32 %v411, %v414
        %417 = vset.pattern.permute.xlu0 2
        %418 = vperm.xlu0 %417, %v347
        %v419 = vpop.permute.xlu0 %418
        %v421 = vmul.f32 %v415, %v419
        %v422 = vmul.f32 %v416, %v419
        %v423 = vadd.f32 %v399, %v421
        %v424 = vadd.f32 %v400, %v422
        %425 = vst [vmem:[#allocation1] ss:$2 sm:$0xff] %v342
        %v426 = vld.sshfl [vmem:[#allocation1] sm:$0xff pattern:$0x75316420]
        %v427 = vld.sshfl [vmem:[#allocation1 + $0x8] sm:$0xff pattern:$0x75316420]
        %430 = vrot.lane.b32.xlu0 %v426, 1
        %v431 = vpop.permute.xlu0 %430
        %432 = vrot.lane.b32.xlu0 %v427, 1
        %v433 = vpop.permute.xlu0 %432
        %vm434 = vcmp.lt.s32.totalorder %v360, 1
        %v435 = vsel %vm434, %v431, %v433
        %v436 = vsel %vm434, %v433, %v431
        %v437 = vperm.slane %v343, 3
        %v438 = vperm.slane %v344, 3
        %v439 = vmul.f32 %v436, %v437
        %v440 = vmul.f32 %v435, %v438
        %441 = vset.pattern.permute.xlu0 3
        %442 = vperm.xlu0 %441, %v347
        %v443 = vpop.permute.xlu0 %442
        %v445 = vmul.f32 %v439, %v443
        %v446 = vmul.f32 %v440, %v443
        %v447 = vadd.f32 %v423, %v445
        %v448 = vadd.f32 %v424, %v446
        %v449 = vperm.slane %v343, 4
        %v450 = vperm.slane %v344, 4
        %v453 = vrot.slane %v450, 4
        %vm454 = vcmask 1043456
        %v455 = vsel %vm454, %v449, %v453
        %v457 = vmul.f32 %v342, %v455
        %458 = vset.pattern.permute.xlu0 4
        %459 = vperm.xlu0 %458, %v347
        %v460 = vpop.permute.xlu0 %459
        %v462 = vunpack.c.l.s4 839922192
        %v463 = vunpack.c.0.s8 %v462
        %v464 = vperm.slane %v460, %v463
        %v466 = vmul.f32 %v457, %v464
        %468 = vst [vmem:[#allocation1] ss:$2 sm:$0xff] %v466
        %v469 = vld.sshfl [vmem:[#allocation1] sm:$0xff pattern:$0x75316420]
        %v470 = vld.sshfl [vmem:[#allocation1 + $0x8] sm:$0xff pattern:$0x75316420]
        %v473 = vadd.f32 %v447, %v469
        %v474 = vadd.f32 %v448, %v470
        %475 = vst [vmem:[#allocation1] ss:$2 sm:$0xff] %v342
        %v476 = vld.sshfl [vmem:[#allocation1] sm:$0xff pattern:$0x75316420]
        %v477 = vld.sshfl [vmem:[#allocation1 + $0x8] sm:$0xff pattern:$0x75316420]
        %480 = vrot.lane.b32.xlu0 %v476, 127
        %v481 = vpop.permute.xlu0 %480
        %482 = vrot.lane.b32.xlu0 %v477, 127
        %v483 = vpop.permute.xlu0 %482
        %vm484 = vcmp.lt.s32.totalorder %v360, 127
        %v485 = vsel %vm484, %v481, %v483
        %v486 = vsel %vm484, %v483, %v481
        %v487 = vperm.slane %v343, 5
        %v488 = vperm.slane %v344, 5
        %v489 = vmul.f32 %v485, %v487
        %v490 = vmul.f32 %v486, %v488
        %491 = vset.pattern.permute.xlu0 5
        %492 = vperm.xlu0 %491, %v347
        %v493 = vpop.permute.xlu0 %492
        %v495 = vmul.f32 %v489, %v493
        %v496 = vmul.f32 %v490, %v493
        %v497 = vadd.f32 %v473, %v495
        %v498 = vadd.f32 %v474, %v496
        %499 = vst [vmem:[#allocation1] ss:$2 sm:$0xff] %v342
        %v500 = vld.sshfl [vmem:[#allocation1] sm:$0xff pattern:$0x75316420]
        %v501 = vld.sshfl [vmem:[#allocation1 + $0x8] sm:$0xff pattern:$0x75316420]
        %504 = vrot.lane.b32.xlu0 %v500, 113
        %v505 = vpop.permute.xlu0 %504
        %506 = vrot.lane.b32.xlu0 %v501, 113
        %v507 = vpop.permute.xlu0 %506
        %vm508 = vcmp.lt.s32.totalorder %v360, 113
        %v509 = vsel %vm508, %v505, %v507
        %v510 = vsel %vm508, %v507, %v505
        %v511 = vperm.slane %v343, 6
        %v512 = vperm.slane %v344, 6
        %v513 = vmul.f32 %v509, %v511
        %v514 = vmul.f32 %v510, %v512
        %515 = vset.pattern.permute.xlu0 6
        %516 = vperm.xlu0 %515, %v347
        %v517 = vpop.permute.xlu0 %516
        %v519 = vmul.f32 %v513, %v517
        %v520 = vmul.f32 %v514, %v517
        %v521 = vadd.f32 %v497, %v519
        %v522 = vadd.f32 %v498, %v520
        %523 = vst [vmem:[#allocation1] ss:$2 sm:$0xff] %v342
        %v524 = vld.sshfl [vmem:[#allocation1] sm:$0xff pattern:$0x75316420]
        %v525 = vld.sshfl [vmem:[#allocation1 + $0x8] sm:$0xff pattern:$0x75316420]
        %528 = vrot.lane.b32.xlu0 %v524, 112
        %v529 = vpop.permute.xlu0 %528
        %530 = vrot.lane.b32.xlu0 %v525, 112
        %v531 = vpop.permute.xlu0 %530
        %vm532 = vcmp.lt.s32.totalorder %v360, 112
        %v533 = vsel %vm532, %v529, %v531
        %v534 = vsel %vm532, %v531, %v529
        %v535 = vperm.slane %v343, 7
        %v536 = vperm.slane %v344, 7
        %v537 = vmul.f32 %v533, %v535
        %v538 = vmul.f32 %v534, %v536
        %539 = vset.pattern.permute.xlu0 7
        %540 = vperm.xlu0 %539, %v347
        %v541 = vpop.permute.xlu0 %540
        %v543 = vmul.f32 %v537, %v541
        %v544 = vmul.f32 %v538, %v541
        %v545 = vadd.f32 %v521, %v543
        %v546 = vadd.f32 %v522, %v544
        %547 = vst [vmem:[#allocation1] ss:$2 sm:$0xff] %v342
        %v548 = vld.sshfl [vmem:[#allocation1] sm:$0xff pattern:$0x75316420]
        %v549 = vld.sshfl [vmem:[#allocation1 + $0x8] sm:$0xff pattern:$0x75316420]
        %552 = vrot.lane.b32.xlu0 %v548, 111
        %v553 = vpop.permute.xlu0 %552
        %554 = vrot.lane.b32.xlu0 %v549, 111
        %v555 = vpop.permute.xlu0 %554
        %vm556 = vcmp.lt.s32.totalorder %v360, 111
        %v557 = vsel %vm556, %v553, %v555
        %v558 = vsel %vm556, %v555, %v553
        %v559 = vperm.slane %v345, 0
        %v560 = vperm.slane %v346, 0
        %v561 = vmul.f32 %v557, %v559
        %v562 = vmul.f32 %v558, %v560
        %563 = vset.pattern.permute.xlu0 8
        %564 = vperm.xlu0 %563, %v347
        %v565 = vpop.permute.xlu0 %564
        %v567 = vmul.f32 %v561, %v565
        %v568 = vmul.f32 %v562, %v565
        %v569 = vadd.f32 %v545, %v567
        %v570 = vadd.f32 %v546, %v568
        %v571 = vld [vmem:[%s3] sm:$0xf]
        %573 = vset.pattern.permute.xlu0 0
        %574 = vperm.xlu0 %573, %v571
        %v575 = vpop.permute.xlu0 %574
        %v577 = vadd.f32 %v569, %v575
        %v578 = vadd.f32 %v570, %v575
        %v579 = vld [vmem:[%s5] sm:$0xff]
        %581 = vset.pattern.permute.xlu0 0
        %582 = vperm.xlu0 %581, %v579
        %v583 = vpop.permute.xlu0 %582
        %v585 = vadd.f32 %v583, 0.0
        %587 = vset.pattern.permute.xlu0 0
        %588 = vperm.xlu0 %587, %v348
        %v589 = vpop.permute.xlu0 %588
        %v591 = vperm.slane %v577, 0
        %v592 = vperm.slane %v578, 0
        %v593 = vmul.f32 %v589, %v591
        %v594 = vmul.f32 %v589, %v592
        %v595 = vadd.f32 %v585, %v593
        %v596 = vadd.f32 %v585, %v594
        %597 = vset.pattern.permute.xlu0 1
        %598 = vperm.xlu0 %597, %v348
        %v599 = vpop.permute.xlu0 %598
        %v601 = vperm.slane %v577, 1
        %v602 = vperm.slane %v578, 1
        %v603 = vmul.f32 %v599, %v601
        %v604 = vmul.f32 %v599, %v602
        %v605 = vadd.f32 %v595, %v603
        %v606 = vadd.f32 %v596, %v604
        %607 = vset.pattern.permute.xlu0 2
        %608 = vperm.xlu0 %607, %v348
        %v609 = vpop.permute.xlu0 %608
        %v611 = vperm.slane %v577, 2
        %v612 = vperm.slane %v578, 2
        %v613 = vmul.f32 %v609, %v611
        %v614 = vmul.f32 %v609, %v612
        %v615 = vadd.f32 %v605, %v613
        %v616 = vadd.f32 %v606, %v614
        %617 = vset.pattern.permute.xlu0 3
        %618 = vperm.xlu0 %617, %v348
        %v619 = vpop.permute.xlu0 %618
        %v621 = vperm.slane %v577, 3
        %v622 = vperm.slane %v578, 3
        %v623 = vmul.f32 %v619, %v621
        %v624 = vmul.f32 %v619, %v622
        %v625 = vadd.f32 %v615, %v623
        %v626 = vadd.f32 %v616, %v624
        %627 = vst [vmem:[%s316] sm:$0xff] %v625
        %628 = vst [vmem:[%s316 + $0x8] sm:$0xff] %v626
        %v629 = vadd.f32 %v625, %v626
        %630 = vadd.xlane.f32.xlu0 %v629
        %v631 = vpop.xlane.xlu0 %630
        %vm632 = vcmask 7168
        %633 = vst.msk [vmem:[%s337] sm:$0xff] %vm632, %v631
        %v634 = vmul.f32 %v625, %v625
        %v635 = vmul.f32 %v626, %v626
        %v636 = vadd.f32 %v634, %v635
        %637 = vadd.xlane.f32.xlu0 %v636
        %v638 = vpop.xlane.xlu0 %637
        %639 = vst.msk [vmem:[%s341] sm:$0xff] %vm632, %v638
        %s640 = sand.u32 %s163, 1
        %s641 = scalar_lea.sflag [#allocation4], %s640
        %s642 = sand.u32 %s163, 1
        %s643 = smul.addr %s642, 16
        %s644 = scalar_lea.vmem [#allocation5], %s643
        %p645 = scmp.lt.s32.totalorder %s24, 1
        %s646 = scalar_select %p645, %s24, 1
        %s647 = smul.addr %s646, 8
        %s648 = scalar_lea.vmem %s7, %s647
        %p649 = scmp.lt.s32.totalorder %s24, 1
        %s650 = scalar_select %p649, %s24, 1
        %s651 = smul.addr %s650, 8
        %s652 = scalar_lea.vmem %s8, %s651
        // Predicated region
        $region49: #{tpu_custom_call.1} parent=43 // pred_check
          %p653 = pneg %p173
        $region50: #{tpu_custom_call.1} parent=43 // pred_check_branch
          %655 = sbr.rel (%p653) target = $region52
        $region51: #{tpu_custom_call.1} parent=43 // pred_region
          %657 = vsyncadd %s641, 0
          %s658 = smul.addr %s24, 2
          %s659 = smul.addr %s658, 8
          %s660 = scalar_lea.hbm %s6, %s659
          %s662 = sshll.u32 %s644, 4
          %s663 = int_to_ptr.vmem [resolvable:$true] %s662
          %s664 = sshll.u32 %s660, 4
          %s665 = int_to_ptr.hbm [resolvable:$true] %s664
          %667 = dma.vmem_to_hbm [thread:$0]  %s663, 256, %s665, %s641
        $region52: #{tpu_custom_call.1} parent=43 // pred_fallthru
          _
        // Predicated region
        $region53: #{tpu_custom_call.1} parent=43 // pred_check
          %p668 = pneg %p199
        $region54: #{tpu_custom_call.1} parent=43 // pred_check_branch
          %670 = sbr.rel (%p668) target = $region56
        $region55: #{tpu_custom_call.1} parent=43 // pred_region
          _
        $region56: #{tpu_custom_call.1} parent=43 // pred_fallthru
          _
        // Predicated region
        $region57: #{tpu_custom_call.1} parent=43 // pred_check
          %p671 = pneg %p225
        $region58: #{tpu_custom_call.1} parent=43 // pred_check_branch
          %673 = sbr.rel (%p671) target = $region60
        $region59: #{tpu_custom_call.1} parent=43 // pred_region
          _
        $region60: #{tpu_custom_call.1} parent=43 // pred_fallthru
          _
      $region44: #{tpu_custom_call.1} parent=5 // pred_fallthru
        _
      %p674 = scmp.le.s32.totalorder 2, %s19
      // Predicated region
      $region61: #{tpu_custom_call.1} parent=5 // pred_check
        %p675 = pneg %p674
      $region62: #{tpu_custom_call.1} parent=5 // pred_check_branch
        %677 = sbr.rel (%p675) target = $region64
      $region63: #{tpu_custom_call.1} parent=5 // pred_region
        %s678 = ssub.s32 %s19, 2
        // Predicated region
        $region65: #{tpu_custom_call.1} parent=63 // pred_check
          %p679 = pneg %p179
        $region66: #{tpu_custom_call.1} parent=63 // pred_check_branch
          %681 = sbr.rel (%p679) target = $region68
        $region67: #{tpu_custom_call.1} parent=63 // pred_region
          %s682 = sand.u32 %s164, 1
          %s683 = scalar_lea.sflag [#allocation4], %s682
          %s684 = sand.u32 %s164, 1
          %s685 = smul.addr %s684, 16
          %s686 = scalar_lea.vmem [#allocation5], %s685
          %688 = dma.done %s683, 256
        $region68: #{tpu_custom_call.1} parent=63 // pred_fallthru
          _
        // Predicated region
        $region69: #{tpu_custom_call.1} parent=63 // pred_check
          %p689 = pneg %p205
        $region70: #{tpu_custom_call.1} parent=63 // pred_check_branch
          %691 = sbr.rel (%p689) target = $region72
        $region71: #{tpu_custom_call.1} parent=63 // pred_region
          %p692 = scmp.lt.s32.totalorder %s25, 1
          %s693 = scalar_select %p692, %s25, 1
          %s694 = smul.addr %s693, 8
          %s695 = scalar_lea.vmem %s7, %s694
        $region72: #{tpu_custom_call.1} parent=63 // pred_fallthru
          _
        // Predicated region
        $region73: #{tpu_custom_call.1} parent=63 // pred_check
          %p696 = pneg %p231
        $region74: #{tpu_custom_call.1} parent=63 // pred_check_branch
          %698 = sbr.rel (%p696) target = $region76
        $region75: #{tpu_custom_call.1} parent=63 // pred_region
          %p699 = scmp.lt.s32.totalorder %s25, 1
          %s700 = scalar_select %p699, %s25, 1
          %s701 = smul.addr %s700, 8
          %s702 = scalar_lea.vmem %s8, %s701
        $region76: #{tpu_custom_call.1} parent=63 // pred_fallthru
          _
      $region64: #{tpu_custom_call.1} parent=5 // pred_fallthru
        _
    $region6: #{tpu_custom_call.1} parent=1 // loop_footer
      %s23 = sadd.s32 1, %s19
    $region7: #{tpu_custom_call.1} parent=1 // loop_footer_branch
      %18 = sbr.rel target = $region3
    $region8: #{tpu_custom_call.1} parent=1 // loop_exit
      _
    %703 = vsyncpa [#allocation3], 1
    %s704 = scalar_lea.sflag [#allocation3], 1
    %705 = vsyncpa %s704, 1
    %706 = vsyncpa [#allocation4], 1
    %s707 = scalar_lea.sflag [#allocation4], 1
    %708 = vsyncpa %s707, 1

</llo_original>
